<compile_context>
chip_gen: v5e
topology: v5e:2x2
jax: 0.10.0
libtpu: 0.0.40
codegen_flags: <defaults>
</compile_context>

<pallas_src>
import functools

import jax
import jax.numpy as jnp
from jax import lax
from jax.experimental import pallas as pl
from jax.experimental.pallas import tpu as pltpu


def _round_up(n, m):
    return (n + m - 1) // m * m


# ------------------------ generation-aware knobs ------------------------------

def _vmem_limit_bytes():
    """Scoped-VMEM cap per TPU generation (None -> leave compiler default)."""
    try:
        kind = jax.devices()[0].device_kind.lower()
    except Exception:
        kind = ""
    if "v5" in kind or "v6" in kind:
        return 96 * 1024 * 1024      # 128 MiB physical on v5e/v6e
    if "v7" in kind:
        return 48 * 1024 * 1024      # 64 MiB physical on v7x
    return None                      # older / unknown: compiler default


def _compiler_params(dimension_semantics):
    kw = dict(dimension_semantics=dimension_semantics)
    lim = _vmem_limit_bytes()
    if lim is not None:
        kw["vmem_limit_bytes"] = lim
    return pltpu.CompilerParams(**kw)


def _pick_cdist_tile(b_pad128, d_pad, budget_bytes):
    """Largest square (8,128)-aligned cdist tile fitting the VMEM budget."""
    tb = 128
    for cand in (1024, 512, 256, 128):
        if cand > b_pad128:
            continue
        # 2 feature slabs x 2 pipeline buffers (f32) + double-buffered out tile
        need = 2 * 2 * cand * d_pad * 4 + 2 * cand * cand * 4
        if need <= budget_bytes:
            tb = cand
            break
    # v7x megacore: keep >= 2 blocks on the parallel axes when the batch allows
    if b_pad128 >= 256 and b_pad128 // tb < 2:
        tb = max(128, ((b_pad128 // 2) // 128) * 128)
    return tb


# ----------------------------- encode kernel ----------------------------------

def _encode_kernel(x_ref, w_ref, b_ref, o_ref):
    # grid = (B_pad/tm, F_pad/tk); axis 1 is the F reduction ("arbitrary").
    # The output block index is invariant over axis 1, so o_ref stays resident
    # in VMEM and doubles as the f32 accumulator (no scratch, no final copy).
    @pl.when(pl.program_id(1) == 0)
    def _():
        o_ref[...] = jnp.broadcast_to(b_ref[...], o_ref.shape)   # bias in init

    o_ref[...] += jnp.dot(x_ref[...], w_ref[...],
                          preferred_element_type=jnp.float32)


def encode_image(images, w, b, *, matmul_dtype=jnp.bfloat16,
                 tile_m=256, tile_k=512):
    """Synthetic CLIP-style image encoder: flatten + linear projection.

    Returns zero-padded-columns features [B_pad, D_pad] in f32.  Padded
    feature columns are exactly zero; padded rows / padded sample columns are
    masked downstream, so the real-region distances are unaffected.
    """
    B = images.shape[0]
    x = images.reshape(B, -1).astype(jnp.float32)
    F = x.shape[1]
    D = w.shape[1]

    b_pad128 = _round_up(B, 128)
    tm = min(tile_m, b_pad128)
    if b_pad128 >= 256 and b_pad128 // tm < 2:
        tm = max(128, ((b_pad128 // 2) // 128) * 128)   # >=2 blocks for megacore
    tk = min(tile_k, _round_up(F, 128))
    tn = _round_up(D, 128)            # full D per block: x streamed exactly once
    B_pad, F_pad, D_pad = _round_up(B, tm), _round_up(F, tk), tn

    # bf16 operands (MXU-native on v5e/v6e/v7x); f32 accumulation in-kernel.
    x_p = jnp.zeros((B_pad, F_pad), matmul_dtype).at[:B, :F].set(
        x.astype(matmul_dtype))
    w_p = jnp.zeros((F_pad, D_pad), matmul_dtype).at[:F, :D].set(
        w.astype(matmul_dtype))
    b_p = jnp.zeros((1, D_pad), jnp.float32).at[:, :D].set(
        b.reshape(1, D).astype(jnp.float32))

    grid = (B_pad // tm, F_pad // tk)
    return pl.pallas_call(
        _encode_kernel,
        out_shape=jax.ShapeDtypeStruct((B_pad, D_pad), jnp.float32),
        grid_spec=pltpu.PrefetchScalarGridSpec(
            num_scalar_prefetch=0,
            grid=grid,
            in_specs=[
                pl.BlockSpec((tm, tk), lambda i, k: (i, k)),
                pl.BlockSpec((tk, tn), lambda i, k: (k, 0)),
                pl.BlockSpec((1, tn), lambda i, k: (0, 0)),
            ],
            out_specs=pl.BlockSpec((tm, tn), lambda i, k: (i, 0)),
        ),
        compiler_params=_compiler_params(("parallel", "arbitrary")),
    )(x_p, w_p, b_p)


# ----------------------------- cdist kernel -----------------------------------

def _cdist_kernel(f_row_ref, f_col_ref, sq_row_ref, sq_col_ref, o_ref, *,
                  tb, n_valid):
    # f_row: [tb, D], f_col: [tb, D], sq_row: [tb, 1], sq_col: [1, tb].
    i = pl.program_id(0)
    j = pl.program_id(1)
    # "NT" gram: contract the last dims of both operands so the MXU consumes
    # the column slab natively (no XLU transpose).
    gram = lax.dot_general(
        f_row_ref[...], f_col_ref[...],
        dimension_numbers=(((1,), (1,)), ((), ())),
        preferred_element_type=jnp.float32)
    # Squared distances only; sqrt is deferred to the tiny LID epilogue.
    d2 = jnp.maximum(sq_row_ref[...] + sq_col_ref[...] - 2.0 * gram, 0.0)
    o_ref[...] = d2

    # Only diagonal tiles and the last column tile ever need masking; interior
    # tiles skip the iota / compare / select epilogue entirely.
    @pl.when((i == j) | (j == pl.num_programs(1) - 1))
    def _():
        row_ids = i * tb + lax.broadcasted_iota(jnp.int32, (tb, tb), 0)
        col_ids = j * tb + lax.broadcasted_iota(jnp.int32, (tb, tb), 1)
        mask = (row_ids == col_ids) | (col_ids >= n_valid)
        o_ref[...] = jnp.where(mask, jnp.inf, d2)


def pairwise_sq_distance(features, n_valid, *, matmul_dtype=jnp.float32,
                         tile_b=None):
    """Tiled mm-based SQUARED euclidean distances (matching torch.cdist with
    compute_mode='use_mm_for_euclid_dist_if_necessary', before the sqrt).

    Returns [B_pad, B_pad] with +inf on the diagonal and on padded columns.
    `n_valid` is the number of real samples (rank 0, single host).
    Keep matmul_dtype=f32: the gram cancels catastrophically for the nearest
    neighbours LID depends on.
    """
    Bf, Df = features.shape
    D_pad = _round_up(Df, 128)
    b_pad128 = _round_up(Bf, 128)
    lim = _vmem_limit_bytes()
    budget = int(0.7 * (lim if lim is not None else 16 * 1024 * 1024))
    tb = tile_b if tile_b is not None else _pick_cdist_tile(b_pad128, D_pad,
                                                            budget)
    B_pad = _round_up(Bf, tb)

    if (Bf, Df) != (B_pad, D_pad):
        f = jnp.zeros((B_pad, D_pad), jnp.float32).at[:Bf, :Df].set(
            features.astype(jnp.float32))
    else:
        f = features.astype(jnp.float32)

    # Row norms hoisted out of the kernel (one reduction total, always f32).
    sq = jnp.sum(f * f, axis=1, keepdims=True)        # [B_pad, 1]
    sq_t = sq.reshape(1, B_pad)                       # [1, B_pad]
    f_mm = f.astype(matmul_dtype)

    grid = (B_pad // tb, B_pad // tb)
    kern = functools.partial(_cdist_kernel, tb=tb, n_valid=n_valid)
    return pl.pallas_call(
        kern,
        out_shape=jax.ShapeDtypeStruct((B_pad, B_pad), jnp.float32),
        grid_spec=pltpu.PrefetchScalarGridSpec(
            num_scalar_prefetch=0,
            grid=grid,
            in_specs=[
                pl.BlockSpec((tb, D_pad), lambda i, j: (i, 0)),
                pl.BlockSpec((tb, D_pad), lambda i, j: (j, 0)),
                pl.BlockSpec((tb, 1), lambda i, j: (i, 0)),
                pl.BlockSpec((1, tb), lambda i, j: (0, j)),
            ],
            out_specs=pl.BlockSpec((tb, tb), lambda i, j: (i, j)),
        ),
        compiler_params=_compiler_params(("parallel", "parallel")),
    )(f_mm, f_mm, sq, sq_t)


# ----------------------------- LID kernel -------------------------------------

def _lid_kernel(a2_ref, o_ref, *, k, est_type):
    # a2: [k+1, B] smallest non-self SQUARED distances per column (ascending
    # along rows); output [1, B] (batch on the lane axis).
    a = jnp.sqrt(a2_ref[...])                 # only (k+1)*B sqrts in total
    a_k = a[k:k + 1, :]                       # [1, B]
    if est_type == 'mle':
        s = jnp.sum(jnp.log(a[:k, :] / a_k + 0.0001), axis=0, keepdims=True)
        o_ref[...] = -float(k) / s
    elif est_type == 'mom':
        m = jnp.mean(a[:k, :], axis=0, keepdims=True)
        o_ref[...] = m / (a_k - m)            # exact divide: denom can be tiny
    else:
        raise ValueError(est_type)


def lid_estimate(a2_sorted, k, est_type):
    """a2_sorted: [B, k+1] ascending nearest non-self squared dists -> [B]."""
    B = a2_sorted.shape[0]
    a_t = a2_sorted.T.astype(jnp.float32)     # tiny transpose -> lane-dense out
    kern = functools.partial(_lid_kernel, k=k, est_type=est_type)
    out = pl.pallas_call(
        kern,
        out_shape=jax.ShapeDtypeStruct((1, B), jnp.float32),
        in_specs=[pl.BlockSpec(memory_space=pltpu.MemorySpace.VMEM)],
        out_specs=pl.BlockSpec(memory_space=pltpu.MemorySpace.VMEM),
    )(a_t)
    return out[0]


# ----------------------------- detector ---------------------------------------

class LIDDetectorPallas:
    """texts=None / gather_distributed=False path of LIDDetector."""
    # TODO(synk): texts path (encode_text + concatenated d_v/d_t) and the
    # distributed gather (misc.gather / rank*b diagonal offset) are not
    # exercised here (no text tower, single host).

    def __init__(self, k=32, est_type='mle', cdist_matmul_dtype=jnp.float32):
        self.k = k
        self.est_type = est_type
        self.cdist_matmul_dtype = cdist_matmul_dtype   # keep f32 (cancellation)

    def __call__(self, encode_image_fn, images):
        B = images.shape[0]
        assert self.k <= B - 2, "need at least k+1 non-self neighbours"
        vision_features = encode_image_fn(images)   # [B_pad, D_pad], f32
        # gather_distributed=False: the reference set is the batch itself.
        d2 = pairwise_sq_distance(vision_features, n_valid=B,
                                  matmul_dtype=self.cdist_matmul_dtype)
        d2 = d2[:B]                                  # drop padded rows
        # Smallest k+1 non-self squared distances, ascending (d^2 is monotone
        # in d, so the selected neighbour set matches torch.sort on d).
        # TODO(synk): lax.top_k/sort has no Pallas TPU lowering; for very large
        # B a fused in-kernel running-(k+1)-smallest buffer would avoid
        # materialising the full [B_pad, B_pad] matrix through HBM.
        a2 = -lax.top_k(-d2, self.k + 1)[0]
        return lid_estimate(a2, self.k, self.est_type)


# ----------------------------- reference (pure JAX) ----------------------------

def _reference_lid(images, w, b, k, est_type):
    B = images.shape[0]
    x = images.reshape(B, -1).astype(jnp.float32)
    f = x @ w.astype(jnp.float32) + b.reshape(1, -1).astype(jnp.float32)
    sq = jnp.sum(f * f, axis=1, keepdims=True)
    d = jnp.sqrt(jnp.maximum(sq + sq.T - 2.0 * (f @ f.T), 0.0))
    cols = jnp.arange(B - 1)
    rows = jnp.arange(B)
    idx = cols[None, :] + (cols[None, :] >= rows[:, None]).astype(jnp.int32)
    r = jnp.take_along_axis(d, idx, axis=1)
    a = jnp.sort(r, axis=1)
    if est_type == 'mle':
        return -k / jnp.sum(jnp.log(a[:, :k] / a[:, k:k + 1] + 0.0001), axis=1)
    m = jnp.mean(a[:, :k], axis=1)
    return m / (a[:, k] - m)


# ----------------------------- main --------------------------------------------

if __name__ == "__main__":
    B, C, H, W = 64, 3, 8, 8      # B must satisfy k <= B - 2
    D = 32                        # feature dim of the synthetic encoder
    K = 32                        # LIDDetector default k

    key = jax.random.PRNGKey(0)
    k_img, k_w = jax.random.split(key)
    images = jax.random.normal(k_img, (B, C, H, W), dtype=jnp.float32)
    enc_w = 0.05 * jax.random.normal(k_w, (C * H * W, D), dtype=jnp.float32)
    enc_b = jnp.zeros((1, D), dtype=jnp.float32)

    # --- strict correctness check: f32 encode + f32 gram vs pure-JAX reference
    enc_f32 = lambda im: encode_image(im, enc_w, enc_b,
                                      matmul_dtype=jnp.float32)
    det_mle = LIDDetectorPallas(k=K, est_type='mle')
    lids_mle = jax.block_until_ready(det_mle(enc_f32, images))
    ref_mle = _reference_lid(images, enc_w, enc_b, K, 'mle')
    assert lids_mle.shape == (B,)
    assert bool(jnp.all(jnp.isfinite(lids_mle)))
    assert bool(jnp.allclose(lids_mle, ref_mle, rtol=5e-3, atol=1e-3)), (
        float(jnp.max(jnp.abs(lids_mle - ref_mle))))

    det_mom = LIDDetectorPallas(k=K, est_type='mom')
    lids_mom = jax.block_until_ready(det_mom(enc_f32, images))
    ref_mom = _reference_lid(images, enc_w, enc_b, K, 'mom')
    assert bool(jnp.allclose(lids_mom, ref_mom, rtol=5e-3, atol=1e-3)), (
        float(jnp.max(jnp.abs(lids_mom - ref_mom))))

    # --- fast path: bf16 encoder matmul (perf default); close but not bit-exact
    enc_bf16 = lambda im: encode_image(im, enc_w, enc_b)   # bf16 by default
    lids_bf16 = jax.block_until_ready(det_mle(enc_bf16, images))
    assert lids_bf16.shape == (B,)
    assert bool(jnp.all(jnp.isfinite(lids_bf16)))

    print("KERNEL_OK")
</pallas_src>

<mosaic_0001>
module attributes {stable_mosaic.version = 11 : i64} {
  func.func @_encode_kernel(%arg0: i32, %arg1: i32, %arg2: memref<128x256xf32, #tpu.memory_space<vmem>>, %arg3: memref<256x128xf32, #tpu.memory_space<vmem>>, %arg4: memref<1x128xf32, #tpu.memory_space<vmem>>, %arg5: memref<128x128xf32, #tpu.memory_space<vmem>>) attributes {dimension_semantics = [#tpu.dimension_semantics<parallel>, #tpu.dimension_semantics<arbitrary>], iteration_bounds = array<i64: 1, 1>, scalar_prefetch = 0 : i64, scratch_operands = 0 : i64, tpu.core_type = #tpu.core_type<tc>, window_params = [{transform_indices = @transform_0, window_bounds = array<i64: 128, 256>}, {transform_indices = @transform_1, window_bounds = array<i64: 256, 128>}, {pipeline_mode = #tpu.pipeline_mode<synchronous>, transform_indices = @transform_2, window_bounds = array<i64: 1, 128>}, {transform_indices = @transform_3, window_bounds = array<i64: 128, 128>}]} {
    %c0_i32 = arith.constant 0 : i32
    %0 = arith.cmpi eq, %arg1, %c0_i32 : i32
    %1 = arith.extui %0 : i1 to i32
    %c0_i32_0 = arith.constant 0 : i32
    %2 = arith.cmpi ne, %1, %c0_i32_0 : i32
    scf.if %2 {
      %c0_8 = arith.constant 0 : index
      %c0_9 = arith.constant 0 : index
      %9 = vector.load %arg4[%c0_8, %c0_9] : memref<1x128xf32, #tpu.memory_space<vmem>>, vector<1x128xf32>
      %10 = vector.shape_cast %9 : vector<1x128xf32> to vector<1x128xf32>
      %11 = vector.broadcast %10 : vector<1x128xf32> to vector<128x128xf32>
      %c0_10 = arith.constant 0 : index
      %c0_11 = arith.constant 0 : index
      %12 = vector.load %arg5[%c0_10, %c0_11] : memref<128x128xf32, #tpu.memory_space<vmem>>, vector<128x128xf32>
      tpu.vector_store %arg5[%c0_10, %c0_11], %11 {strides = array<i32>} : memref<128x128xf32, #tpu.memory_space<vmem>>, vector<128x128xf32>,
    } else {
    }
    %c0 = arith.constant 0 : index
    %c0_1 = arith.constant 0 : index
    %3 = vector.load %arg5[%c0, %c0_1] : memref<128x128xf32, #tpu.memory_space<vmem>>, vector<128x128xf32>
    %c0_2 = arith.constant 0 : index
    %c0_3 = arith.constant 0 : index
    %4 = vector.load %arg2[%c0_2, %c0_3] : memref<128x256xf32, #tpu.memory_space<vmem>>, vector<128x256xf32>
    %c0_4 = arith.constant 0 : index
    %c0_5 = arith.constant 0 : index
    %5 = vector.load %arg3[%c0_4, %c0_5] : memref<256x128xf32, #tpu.memory_space<vmem>>, vector<256x128xf32>
    %cst = arith.constant dense<0.000000e+00> : vector<128x128xf32>
    %6 = tpu.matmul %4, %5, %cst {dimension_numbers = #tpu.dot_dimension_numbers<[1], [0], [0], [1], [0, 0, 1, 1], [], []>} : vector<128x256xf32>, vector<256x128xf32>, vector<128x128xf32> -> vector<128x128xf32>
    %7 = arith.addf %3, %6 : vector<128x128xf32>
    %c0_6 = arith.constant 0 : index
    %c0_7 = arith.constant 0 : index
    %8 = vector.load %arg5[%c0_6, %c0_7] : memref<128x128xf32, #tpu.memory_space<vmem>>, vector<128x128xf32>
    tpu.vector_store %arg5[%c0_6, %c0_7], %7 {strides = array<i32>} : memref<128x128xf32, #tpu.memory_space<vmem>>, vector<128x128xf32>,
    return
  }
  func.func @transform_0(%arg0: i32, %arg1: i32) -> (i32, i32) {
    %c0_i32 = arith.constant 0 : i32
    return %arg0, %arg1 : i32, i32
  }
  func.func @transform_1(%arg0: i32, %arg1: i32) -> (i32, i32) {
    %c0_i32 = arith.constant 0 : i32
    %c0_i32_0 = arith.constant 0 : i32
    return %arg1, %c0_i32 : i32, i32
  }
  func.func @transform_2(%arg0: i32, %arg1: i32) -> (i32, i32) {
    %c0_i32 = arith.constant 0 : i32
    %c0_i32_0 = arith.constant 0 : i32
    %c0_i32_1 = arith.constant 0 : i32
    return %c0_i32, %c0_i32_0 : i32, i32
  }
  func.func @transform_3(%arg0: i32, %arg1: i32) -> (i32, i32) {
    %c0_i32 = arith.constant 0 : i32
    %c0_i32_0 = arith.constant 0 : i32
    return %arg0, %c0_i32 : i32, i32
  }
}

</mosaic_0001>

<llo_original>
// kernel: tpu_custom_call.1
$region0: #{tpu_custom_call.1}
  #allocation0 [shape = 'u32[]', space=smem, size = 0x4, offset = 0x4, fixed_abs, tag = 'smem constant byte address 0x4 - core index']
  #allocation1 [shape = 'u32[72,128]{1,0:T(1,128)}', space=vmem, size = 0x9000, scoped, tag = 'internal scratch']
  %s0 = inlined_call_operand.hbm [shape: f32[128,256], index: 0, kind: input, shape index: {}]
  %s1 = inlined_call_operand.hbm [shape: f32[256,128], index: 1, kind: input, shape index: {}]
  %s2 = inlined_call_operand.vmem [shape: f32[1,128], index: 2, kind: input, shape index: {}]
  %s3 = inlined_call_operand.hbm [shape: f32[128,128], index: 3, kind: output, shape index: {}]
  %s4 = sld [smem:[#allocation0]]
  $region34: #{tpu_custom_call.1} parent=0
    _
  %s6 = ssub.s32 1, %s4
  %s7 = scalar_select 0, %s6, %s4
  $region1: #{tpu_custom_call.1} parent=0
    #allocation2 [shape = 'u8[131072]{0}', space=vmem, size = 0x20000, scoped, tag = 'input window, operand 0, single buffered']
    #allocation3 [shape = 's32[1]{0}', space=sflag, size = 0x4, scoped, tag = 'scoped memory for tpu_custom_call.1']
    #allocation4 [shape = 's32[1]{0}', space=sflag, size = 0x4, scoped, tag = 'scoped memory for tpu_custom_call.1']
    #allocation5 [shape = 'u8[131072]{0}', space=vmem, size = 0x20000, scoped, tag = 'input window, operand 1, single buffered']
    #allocation6 [shape = 's32[1]{0}', space=sflag, size = 0x4, scoped, tag = 'scoped memory for tpu_custom_call.1']
    #allocation7 [shape = 'u8[65536]{0}', space=vmem, size = 0x10000, scoped, tag = 'output window, operand 0, single buffered']
    %8 = vsyncpa [#allocation3], 0
    %9 = vsyncpa [#allocation6], 0
    %10 = vsyncpa [#allocation4], 0
    // Predicated region
    $region2: #{tpu_custom_call.1} parent=1 // pred_check
      _
    $region3: #{tpu_custom_call.1} parent=1 // pred_check_branch
      %12 = sbr.rel (0) target = $region5
    $region4: #{tpu_custom_call.1} parent=1 // pred_region
      %14 = vsyncadd [#allocation3], 0
      %s15 = sshll.u32 %s0, 4
      %s16 = int_to_ptr.hbm [resolvable:$true] %s15
      %s17 = sshll.u32 [#allocation2], 4
      %s18 = int_to_ptr.vmem [resolvable:$true] %s17
      %23 = dma.hbm_to_vmem [thread:$0]  %s16, 4096, %s18, [#allocation3], 256, 256, 16
    $region5: #{tpu_custom_call.1} parent=1 // pred_fallthru
      _
    // Predicated region
    $region6: #{tpu_custom_call.1} parent=1 // pred_check
      _
    $region7: #{tpu_custom_call.1} parent=1 // pred_check_branch
      %25 = sbr.rel (0) target = $region9
    $region8: #{tpu_custom_call.1} parent=1 // pred_region
      %27 = vsyncadd [#allocation6], 0
      %s28 = sshll.u32 %s1, 4
      %s29 = int_to_ptr.hbm [resolvable:$true] %s28
      %s30 = sshll.u32 [#allocation5], 4
      %s31 = int_to_ptr.vmem [resolvable:$true] %s30
      %36 = dma.hbm_to_vmem [thread:$0]  %s29, 4096, %s31, [#allocation6], 128, 128, 8
    $region9: #{tpu_custom_call.1} parent=1 // pred_fallthru
      _
    // Predicated region
    $region10: #{tpu_custom_call.1} parent=1 // pred_check
      _
    $region11: #{tpu_custom_call.1} parent=1 // pred_check_branch
      %38 = sbr.rel (0) target = $region13
    $region12: #{tpu_custom_call.1} parent=1 // pred_region
      _
    $region13: #{tpu_custom_call.1} parent=1 // pred_fallthru
      _
    // Predicated region
    $region14: #{tpu_custom_call.1} parent=1 // pred_check
      _
    $region15: #{tpu_custom_call.1} parent=1 // pred_check_branch
      %40 = sbr.rel (0) target = $region17
    $region16: #{tpu_custom_call.1} parent=1 // pred_region
      %42 = dma.done [#allocation3], 4096
    $region17: #{tpu_custom_call.1} parent=1 // pred_fallthru
      _
    // Predicated region
    $region18: #{tpu_custom_call.1} parent=1 // pred_check
      _
    $region19: #{tpu_custom_call.1} parent=1 // pred_check_branch
      %44 = sbr.rel (0) target = $region21
    $region20: #{tpu_custom_call.1} parent=1 // pred_region
      %46 = dma.done [#allocation6], 4096
    $region21: #{tpu_custom_call.1} parent=1 // pred_fallthru
      _
    %p47 = scmp.eq.s32.totalorder 0, 0
    // Predicated region
    $region22: #{tpu_custom_call.1} parent=1 // pred_check
      %p48 = pneg %p47
    $region23: #{tpu_custom_call.1} parent=1 // pred_check_branch
      %50 = sbr.rel (%p48) target = $region25
    $region24: #{tpu_custom_call.1} parent=1 // pred_region
      %v51 = vld [vmem:[%s2] sm:$0x1]
      %v53 = vperm.slane %v51, 0
      %55 = vst [vmem:[#allocation7] sm:$0xff] %v53
      %56 = vst [vmem:[#allocation7 + $0x8] sm:$0xff] %v53
      %57 = vst [vmem:[#allocation7 + $0x10] sm:$0xff] %v53
      %58 = vst [vmem:[#allocation7 + $0x18] sm:$0xff] %v53
      %59 = vst [vmem:[#allocation7 + $0x20] sm:$0xff] %v53
      %60 = vst [vmem:[#allocation7 + $0x28] sm:$0xff] %v53
      %61 = vst [vmem:[#allocation7 + $0x30] sm:$0xff] %v53
      %62 = vst [vmem:[#allocation7 + $0x38] sm:$0xff] %v53
      %63 = vst [vmem:[#allocation7 + $0x40] sm:$0xff] %v53
      %64 = vst [vmem:[#allocation7 + $0x48] sm:$0xff] %v53
      %65 = vst [vmem:[#allocation7 + $0x50] sm:$0xff] %v53
      %66 = vst [vmem:[#allocation7 + $0x58] sm:$0xff] %v53
      %67 = vst [vmem:[#allocation7 + $0x60] sm:$0xff] %v53
      %68 = vst [vmem:[#allocation7 + $0x68] sm:$0xff] %v53
      %69 = vst [vmem:[#allocation7 + $0x70] sm:$0xff] %v53
      %70 = vst [vmem:[#allocation7 + $0x78] sm:$0xff] %v53
    $region25: #{tpu_custom_call.1} parent=1 // pred_fallthru
      _
    %v71 = vld [vmem:[#allocation7] sm:$0xff]
    %v72 = vld [vmem:[#allocation7 + $0x8] sm:$0xff]
    %v73 = vld [vmem:[#allocation7 + $0x10] sm:$0xff]
    %v74 = vld [vmem:[#allocation7 + $0x18] sm:$0xff]
    %v75 = vld [vmem:[#allocation7 + $0x20] sm:$0xff]
    %v76 = vld [vmem:[#allocation7 + $0x28] sm:$0xff]
    %v77 = vld [vmem:[#allocation7 + $0x30] sm:$0xff]
    %v78 = vld [vmem:[#allocation7 + $0x38] sm:$0xff]
    %v79 = vld [vmem:[#allocation7 + $0x40] sm:$0xff]
    %v80 = vld [vmem:[#allocation7 + $0x48] sm:$0xff]
    %v81 = vld [vmem:[#allocation7 + $0x50] sm:$0xff]
    %v82 = vld [vmem:[#allocation7 + $0x58] sm:$0xff]
    %v83 = vld [vmem:[#allocation7 + $0x60] sm:$0xff]
    %v84 = vld [vmem:[#allocation7 + $0x68] sm:$0xff]
    %v85 = vld [vmem:[#allocation7 + $0x70] sm:$0xff]
    %v86 = vld [vmem:[#allocation7 + $0x78] sm:$0xff]
    %v87 = vld [vmem:[#allocation2] sm:$0xff]
    %v88 = vld [vmem:[#allocation2 + $0x8] sm:$0xff]
    %v89 = vld [vmem:[#allocation2 + $0x10] sm:$0xff]
    %v90 = vld [vmem:[#allocation2 + $0x18] sm:$0xff]
    %v91 = vld [vmem:[#allocation2 + $0x20] sm:$0xff]
    %v92 = vld [vmem:[#allocation2 + $0x28] sm:$0xff]
    %v93 = vld [vmem:[#allocation2 + $0x30] sm:$0xff]
    %v94 = vld [vmem:[#allocation2 + $0x38] sm:$0xff]
    %v95 = vld [vmem:[#allocation2 + $0x40] sm:$0xff]
    %v96 = vld [vmem:[#allocation2 + $0x48] sm:$0xff]
    %v97 = vld [vmem:[#allocation2 + $0x50] sm:$0xff]
    %v98 = vld [vmem:[#allocation2 + $0x58] sm:$0xff]
    %v99 = vld [vmem:[#allocation2 + $0x60] sm:$0xff]
    %v100 = vld [vmem:[#allocation2 + $0x68] sm:$0xff]
    %v101 = vld [vmem:[#allocation2 + $0x70] sm:$0xff]
    %v102 = vld [vmem:[#allocation2 + $0x78] sm:$0xff]
    %v103 = vld [vmem:[#allocation2 + $0x80] sm:$0xff]
    %v104 = vld [vmem:[#allocation2 + $0x88] sm:$0xff]
    %v105 = vld [vmem:[#allocation2 + $0x90] sm:$0xff]
    %v106 = vld [vmem:[#allocation2 + $0x98] sm:$0xff]
    %v107 = vld [vmem:[#allocation2 + $0xa0] sm:$0xff]
    %v108 = vld [vmem:[#allocation2 + $0xa8] sm:$0xff]
    %v109 = vld [vmem:[#allocation2 + $0xb0] sm:$0xff]
    %v110 = vld [vmem:[#allocation2 + $0xb8] sm:$0xff]
    %v111 = vld [vmem:[#allocation2 + $0xc0] sm:$0xff]
    %v112 = vld [vmem:[#allocation2 + $0xc8] sm:$0xff]
    %v113 = vld [vmem:[#allocation2 + $0xd0] sm:$0xff]
    %v114 = vld [vmem:[#allocation2 + $0xd8] sm:$0xff]
    %v115 = vld [vmem:[#allocation2 + $0xe0] sm:$0xff]
    %v116 = vld [vmem:[#allocation2 + $0xe8] sm:$0xff]
    %v117 = vld [vmem:[#allocation2 + $0xf0] sm:$0xff]
    %v118 = vld [vmem:[#allocation2 + $0xf8] sm:$0xff]
    %v119 = vld [vmem:[#allocation5] sm:$0xff]
    %v120 = vld [vmem:[#allocation5 + $0x8] sm:$0xff]
    %v121 = vld [vmem:[#allocation5 + $0x10] sm:$0xff]
    %v122 = vld [vmem:[#allocation5 + $0x18] sm:$0xff]
    %v123 = vld [vmem:[#allocation5 + $0x20] sm:$0xff]
    %v124 = vld [vmem:[#allocation5 + $0x28] sm:$0xff]
    %v125 = vld [vmem:[#allocation5 + $0x30] sm:$0xff]
    %v126 = vld [vmem:[#allocation5 + $0x38] sm:$0xff]
    %v127 = vld [vmem:[#allocation5 + $0x40] sm:$0xff]
    %v128 = vld [vmem:[#allocation5 + $0x48] sm:$0xff]
    %v129 = vld [vmem:[#allocation5 + $0x50] sm:$0xff]
    %v130 = vld [vmem:[#allocation5 + $0x58] sm:$0xff]
    %v131 = vld [vmem:[#allocation5 + $0x60] sm:$0xff]
    %v132 = vld [vmem:[#allocation5 + $0x68] sm:$0xff]
    %v133 = vld [vmem:[#allocation5 + $0x70] sm:$0xff]
    %v134 = vld [vmem:[#allocation5 + $0x78] sm:$0xff]
    %v135 = vld [vmem:[#allocation5 + $0x80] sm:$0xff]
    %v136 = vld [vmem:[#allocation5 + $0x88] sm:$0xff]
    %v137 = vld [vmem:[#allocation5 + $0x90] sm:$0xff]
    %v138 = vld [vmem:[#allocation5 + $0x98] sm:$0xff]
    %v139 = vld [vmem:[#allocation5 + $0xa0] sm:$0xff]
    %v140 = vld [vmem:[#allocation5 + $0xa8] sm:$0xff]
    %v141 = vld [vmem:[#allocation5 + $0xb0] sm:$0xff]
    %v142 = vld [vmem:[#allocation5 + $0xb8] sm:$0xff]
    %v143 = vld [vmem:[#allocation5 + $0xc0] sm:$0xff]
    %v144 = vld [vmem:[#allocation5 + $0xc8] sm:$0xff]
    %v145 = vld [vmem:[#allocation5 + $0xd0] sm:$0xff]
    %v146 = vld [vmem:[#allocation5 + $0xd8] sm:$0xff]
    %v147 = vld [vmem:[#allocation5 + $0xe0] sm:$0xff]
    %v148 = vld [vmem:[#allocation5 + $0xe8] sm:$0xff]
    %v149 = vld [vmem:[#allocation5 + $0xf0] sm:$0xff]
    %v150 = vld [vmem:[#allocation5 + $0xf8] sm:$0xff]
    %151 = vmatpush.msra.mxu0 %v134
    %152 = vmatpush.msra.mxu0 %v133
    %153 = vmatpush.msra.mxu0 %v132
    %154 = vmatpush.msra.mxu0 %v131
    %155 = vmatpush.msra.mxu0 %v130
    %156 = vmatpush.msra.mxu0 %v129
    %157 = vmatpush.msra.mxu0 %v128
    %158 = vmatpush.msra.mxu0 %v127
    %159 = vmatpush.msra.mxu0 %v126
    %160 = vmatpush.msra.mxu0 %v125
    %161 = vmatpush.msra.mxu0 %v124
    %162 = vmatpush.msra.mxu0 %v123
    %163 = vmatpush.msra.mxu0 %v122
    %164 = vmatpush.msra.mxu0 %v121
    %165 = vmatpush.msra.mxu0 %v120
    %166 = vmatpush.msra.mxu0 %v119
    %167 = vmatmul.f32.gmra.mxu0 %v87
    %v168 = vpop.f32.mrf.mxu0
    %v169 = vadd.f32 0.0, %v168
    %170 = vmatmul.f32.gmra.mxu0 %v89
    %v171 = vpop.f32.mrf.mxu0
    %v172 = vadd.f32 0.0, %v171
    %173 = vmatmul.f32.gmra.mxu0 %v91
    %v174 = vpop.f32.mrf.mxu0
    %v175 = vadd.f32 0.0, %v174
    %176 = vmatmul.f32.gmra.mxu0 %v93
    %v177 = vpop.f32.mrf.mxu0
    %v178 = vadd.f32 0.0, %v177
    %179 = vmatmul.f32.gmra.mxu0 %v95
    %v180 = vpop.f32.mrf.mxu0
    %v181 = vadd.f32 0.0, %v180
    %182 = vmatmul.f32.gmra.mxu0 %v97
    %v183 = vpop.f32.mrf.mxu0
    %v184 = vadd.f32 0.0, %v183
    %185 = vmatmul.f32.gmra.mxu0 %v99
    %v186 = vpop.f32.mrf.mxu0
    %v187 = vadd.f32 0.0, %v186
    %188 = vmatmul.f32.gmra.mxu0 %v101
    %v189 = vpop.f32.mrf.mxu0
    %v190 = vadd.f32 0.0, %v189
    %191 = vmatmul.f32.gmra.mxu0 %v103
    %v192 = vpop.f32.mrf.mxu0
    %v193 = vadd.f32 0.0, %v192
    %194 = vmatmul.f32.gmra.mxu0 %v105
    %v195 = vpop.f32.mrf.mxu0
    %v196 = vadd.f32 0.0, %v195
    %197 = vmatmul.f32.gmra.mxu0 %v107
    %v198 = vpop.f32.mrf.mxu0
    %v199 = vadd.f32 0.0, %v198
    %200 = vmatmul.f32.gmra.mxu0 %v109
    %v201 = vpop.f32.mrf.mxu0
    %v202 = vadd.f32 0.0, %v201
    %203 = vmatmul.f32.gmra.mxu0 %v111
    %v204 = vpop.f32.mrf.mxu0
    %v205 = vadd.f32 0.0, %v204
    %206 = vmatmul.f32.gmra.mxu0 %v113
    %v207 = vpop.f32.mrf.mxu0
    %v208 = vadd.f32 0.0, %v207
    %209 = vmatmul.f32.gmra.mxu0 %v115
    %v210 = vpop.f32.mrf.mxu0
    %v211 = vadd.f32 0.0, %v210
    %212 = vmatmul.f32.gmra.mxu0 %v117
    %v213 = vpop.f32.mrf.mxu0
    %v214 = vadd.f32 0.0, %v213
    %215 = vdwg.mxu0
    %216 = vmatpush.msra.mxu0 %v150
    %217 = vmatpush.msra.mxu0 %v149
    %218 = vmatpush.msra.mxu0 %v148
    %219 = vmatpush.msra.mxu0 %v147
    %220 = vmatpush.msra.mxu0 %v146
    %221 = vmatpush.msra.mxu0 %v145
    %222 = vmatpush.msra.mxu0 %v144
    %223 = vmatpush.msra.mxu0 %v143
    %224 = vmatpush.msra.mxu0 %v142
    %225 = vmatpush.msra.mxu0 %v141
    %226 = vmatpush.msra.mxu0 %v140
    %227 = vmatpush.msra.mxu0 %v139
    %228 = vmatpush.msra.mxu0 %v138
    %229 = vmatpush.msra.mxu0 %v137
    %230 = vmatpush.msra.mxu0 %v136
    %231 = vmatpush.msra.mxu0 %v135
    %232 = vmatmul.f32.gmra.mxu0 %v88
    %v233 = vpop.f32.mrf.mxu0
    %v234 = vadd.f32 %v169, %v233
    %235 = vmatmul.f32.gmra.mxu0 %v90
    %v236 = vpop.f32.mrf.mxu0
    %v237 = vadd.f32 %v172, %v236
    %238 = vmatmul.f32.gmra.mxu0 %v92
    %v239 = vpop.f32.mrf.mxu0
    %v240 = vadd.f32 %v175, %v239
    %241 = vmatmul.f32.gmra.mxu0 %v94
    %v242 = vpop.f32.mrf.mxu0
    %v243 = vadd.f32 %v178, %v242
    %244 = vmatmul.f32.gmra.mxu0 %v96
    %v245 = vpop.f32.mrf.mxu0
    %v246 = vadd.f32 %v181, %v245
    %247 = vmatmul.f32.gmra.mxu0 %v98
    %v248 = vpop.f32.mrf.mxu0
    %v249 = vadd.f32 %v184, %v248
    %250 = vmatmul.f32.gmra.mxu0 %v100
    %v251 = vpop.f32.mrf.mxu0
    %v252 = vadd.f32 %v187, %v251
    %253 = vmatmul.f32.gmra.mxu0 %v102
    %v254 = vpop.f32.mrf.mxu0
    %v255 = vadd.f32 %v190, %v254
    %256 = vmatmul.f32.gmra.mxu0 %v104
    %v257 = vpop.f32.mrf.mxu0
    %v258 = vadd.f32 %v193, %v257
    %259 = vmatmul.f32.gmra.mxu0 %v106
    %v260 = vpop.f32.mrf.mxu0
    %v261 = vadd.f32 %v196, %v260
    %262 = vmatmul.f32.gmra.mxu0 %v108
    %v263 = vpop.f32.mrf.mxu0
    %v264 = vadd.f32 %v199, %v263
    %265 = vmatmul.f32.gmra.mxu0 %v110
    %v266 = vpop.f32.mrf.mxu0
    %v267 = vadd.f32 %v202, %v266
    %268 = vmatmul.f32.gmra.mxu0 %v112
    %v269 = vpop.f32.mrf.mxu0
    %v270 = vadd.f32 %v205, %v269
    %271 = vmatmul.f32.gmra.mxu0 %v114
    %v272 = vpop.f32.mrf.mxu0
    %v273 = vadd.f32 %v208, %v272
    %274 = vmatmul.f32.gmra.mxu0 %v116
    %v275 = vpop.f32.mrf.mxu0
    %v276 = vadd.f32 %v211, %v275
    %277 = vmatmul.f32.gmra.mxu0 %v118
    %v278 = vpop.f32.mrf.mxu0
    %v279 = vadd.f32 %v214, %v278
    %280 = vdwg.mxu0
    %v281 = vadd.f32 %v71, %v234
    %v282 = vadd.f32 %v72, %v237
    %v283 = vadd.f32 %v73, %v240
    %v284 = vadd.f32 %v74, %v243
    %v285 = vadd.f32 %v75, %v246
    %v286 = vadd.f32 %v76, %v249
    %v287 = vadd.f32 %v77, %v252
    %v288 = vadd.f32 %v78, %v255
    %v289 = vadd.f32 %v79, %v258
    %v290 = vadd.f32 %v80, %v261
    %v291 = vadd.f32 %v81, %v264
    %v292 = vadd.f32 %v82, %v267
    %v293 = vadd.f32 %v83, %v270
    %v294 = vadd.f32 %v84, %v273
    %v295 = vadd.f32 %v85, %v276
    %v296 = vadd.f32 %v86, %v279
    %297 = vst [vmem:[#allocation7] sm:$0xff] %v281
    %298 = vst [vmem:[#allocation7 + $0x8] sm:$0xff] %v282
    %299 = vst [vmem:[#allocation7 + $0x10] sm:$0xff] %v283
    %300 = vst [vmem:[#allocation7 + $0x18] sm:$0xff] %v284
    %301 = vst [vmem:[#allocation7 + $0x20] sm:$0xff] %v285
    %302 = vst [vmem:[#allocation7 + $0x28] sm:$0xff] %v286
    %303 = vst [vmem:[#allocation7 + $0x30] sm:$0xff] %v287
    %304 = vst [vmem:[#allocation7 + $0x38] sm:$0xff] %v288
    %305 = vst [vmem:[#allocation7 + $0x40] sm:$0xff] %v289
    %306 = vst [vmem:[#allocation7 + $0x48] sm:$0xff] %v290
    %307 = vst [vmem:[#allocation7 + $0x50] sm:$0xff] %v291
    %308 = vst [vmem:[#allocation7 + $0x58] sm:$0xff] %v292
    %309 = vst [vmem:[#allocation7 + $0x60] sm:$0xff] %v293
    %310 = vst [vmem:[#allocation7 + $0x68] sm:$0xff] %v294
    %311 = vst [vmem:[#allocation7 + $0x70] sm:$0xff] %v295
    %312 = vst [vmem:[#allocation7 + $0x78] sm:$0xff] %v296
    // Predicated region
    $region26: #{tpu_custom_call.1} parent=1 // pred_check
      _
    $region27: #{tpu_custom_call.1} parent=1 // pred_check_branch
      %314 = sbr.rel (0) target = $region29
    $region28: #{tpu_custom_call.1} parent=1 // pred_region
      %316 = vsyncadd [#allocation4], 0
      %s317 = sshll.u32 [#allocation7], 4
      %s318 = int_to_ptr.vmem [resolvable:$true] %s317
      %s319 = sshll.u32 %s3, 4
      %s320 = int_to_ptr.hbm [resolvable:$true] %s319
      %325 = dma.vmem_to_hbm [thread:$0]  %s318, 2048, %s320, [#allocation4], 128, 128, 8
    $region29: #{tpu_custom_call.1} parent=1 // pred_fallthru
      _
    // Predicated region
    $region30: #{tpu_custom_call.1} parent=1 // pred_check
      _
    $region31: #{tpu_custom_call.1} parent=1 // pred_check_branch
      %327 = sbr.rel (0) target = $region33
    $region32: #{tpu_custom_call.1} parent=1 // pred_region
      %329 = dma.done [#allocation4], 2048
    $region33: #{tpu_custom_call.1} parent=1 // pred_fallthru
      _
    %330 = vsyncpa [#allocation3], 1
    %331 = vsyncpa [#allocation6], 1
    %332 = vsyncpa [#allocation4], 1

</llo_original>
